<compile_context>
chip_gen: v7x
topology: tpu7x:2x2x1
jax: 0.10.0
libtpu: 0.0.40
codegen_flags: <defaults>
</compile_context>

<pallas_src>
import functools

import jax
import jax.numpy as jnp
from jax.experimental import pallas as pl
from jax.experimental.pallas import tpu as pltpu

NUM_LAYERS = 20


# ---------------------------------------------------------------------------
# Kernels
# ---------------------------------------------------------------------------
def hit_affine_kernel(x_ref, w_ref, b_ref, o_ref):
    """Collapsed branch: o = x @ W_eff + b_eff in one f32 MXU pass.

    x_ref: (bt, F) f32   w_ref: (F, F) f32   b_ref: (1, F) f32   o_ref: (bt, F) f32
    """
    o_ref[...] = (
        jnp.dot(x_ref[...], w_ref[...], preferred_element_type=jnp.float32)
        + b_ref[...]
    )


def hit_chain_kernel(x_ref, wt_ref, b_ref, o_ref, *, num_streams):
    """Fallback: fused 20-layer affine chain (weights change every call).

    x_ref : (B, F)     f32   (cast to bf16 in-kernel)
    wt_ref: (L, F, F)  bf16, pre-transposed so each layer is h @ wt[i]
    b_ref : (L, F)     f32
    o_ref : (B, F)     f32

    The batch is split into `num_streams` independent halves so layer i of
    stream 1 overlaps the MXU result drain of stream 0 (the chain is
    latency-bound, not throughput-bound).
    """
    batch = x_ref.shape[0]
    size = batch // num_streams
    hs = [
        x_ref[pl.ds(s * size, size), :].astype(jnp.bfloat16)
        for s in range(num_streams)
    ]
    for i in range(NUM_LAYERS):                  # static unroll (LLO visibility)
        w_i = wt_ref[i]                          # (F, F) bf16
        b_i = b_ref[pl.ds(i, 1), :]              # (1, F) f32
        accs = [
            jnp.dot(h, w_i, preferred_element_type=jnp.float32) + b_i for h in hs
        ]
        if i < NUM_LAYERS - 1:
            hs = [a.astype(jnp.bfloat16) for a in accs]
        else:
            for s in range(num_streams):
                o_ref[pl.ds(s * size, size), :] = accs[s]


# ---------------------------------------------------------------------------
# Primary path: weights reused across calls -> collapse once, single matmul.
# ---------------------------------------------------------------------------
def make_hit_model(w_stack, b_stack):
    """w_stack: (L, F_out, F_in) PyTorch-layout weights; b_stack: (L, F)."""
    L, F_out, F_in = w_stack.shape
    assert L == NUM_LAYERS and F_out == F_in
    F = F_in

    # Fold the whole bias-only chain into one (W_eff, b_eff), computed in f32
    # and KEPT in f32 (precision; the single matmul's cost is negligible).
    wt = jnp.transpose(w_stack, (0, 2, 1)).astype(jnp.float32)   # (L, F_in, F_out)
    bs = b_stack.astype(jnp.float32)
    w_eff = jnp.eye(F, dtype=jnp.float32)
    b_eff = jnp.zeros((F,), dtype=jnp.float32)
    for i in range(L):
        w_eff = w_eff @ wt[i]
        b_eff = b_eff @ wt[i] + bs[i]
    b_eff = b_eff.reshape(1, F)
    w_eff, b_eff = jax.block_until_ready((w_eff, b_eff))

    @jax.jit
    def forward(x):
        B = x.shape[0]
        # Single full-batch VMEM block at small sizes (v5e/v6e: one TC, and the
        # per-step grid overhead exceeds the compute; v7x: cross-TC split not
        # worth it at this size).  Only tile the batch when B is large.
        if B >= 1024 and B % 256 == 0:
            bt, nb, sem = 256, B // 256, ("parallel",)
        else:
            bt, nb, sem = B, 1, ("arbitrary",)
        return pl.pallas_call(
            hit_affine_kernel,
            out_shape=jax.ShapeDtypeStruct((B, F), jnp.float32),
            grid=(nb,),
            in_specs=[
                pl.BlockSpec((bt, F), lambda i: (i, 0)),   # raw x, no padding
                pl.BlockSpec((F, F), lambda i: (0, 0)),    # W_eff resident
                pl.BlockSpec((1, F), lambda i: (0, 0)),    # b_eff resident
            ],
            out_specs=pl.BlockSpec((bt, F), lambda i: (i, 0)),
            compiler_params=pltpu.CompilerParams(dimension_semantics=sem),
        )(x, w_eff, b_eff)

    return forward


# ---------------------------------------------------------------------------
# Fallback path: weights change every call -> fused 20-layer chain kernel.
# Weights are forward() arguments (per-call prep is just transpose + cast).
# ---------------------------------------------------------------------------
@jax.jit
def hit_chain_forward(x, w_stack, b_stack):
    B, F = x.shape
    L = w_stack.shape[0]
    wt = jnp.transpose(w_stack, (0, 2, 1)).astype(jnp.bfloat16)   # (L, F_in, F_out)
    bs = b_stack.astype(jnp.float32)
    num_streams = 2 if (B % 2 == 0 and B >= 32) else 1
    kernel = functools.partial(hit_chain_kernel, num_streams=num_streams)
    # TODO(synk): add a layer-axis grid (one layer's weights resident) if F
    # ever grows past ~512, to stay under v7x's 64 MiB VMEM.
    return pl.pallas_call(
        kernel,
        out_shape=jax.ShapeDtypeStruct((B, F), jnp.float32),
        grid=(1,),
        in_specs=[
            pl.BlockSpec((B, F), lambda i: (0, 0)),
            pl.BlockSpec((L, F, F), lambda i: (0, 0, 0)),
            pl.BlockSpec((L, F), lambda i: (0, 0)),
        ],
        out_specs=pl.BlockSpec((B, F), lambda i: (0, 0)),
    )(x, wt, bs)


# ---------------------------------------------------------------------------
# Reference (matches the PyTorch module semantics in f32)
# ---------------------------------------------------------------------------
def _reference(x, w_stack, b_stack):
    h = x
    for i in range(w_stack.shape[0]):
        h = h @ w_stack[i].T + b_stack[i]
    return h


if __name__ == "__main__":
    # Small deterministic setup: in_features=32, batch=256.
    B, F = 256, 32

    key = jax.random.PRNGKey(0)
    k_x, k_w, k_b = jax.random.split(key, 3)
    x = jax.random.normal(k_x, (B, F), dtype=jnp.float32)

    # PyTorch nn.Linear default init: U(-1/sqrt(fan_in), 1/sqrt(fan_in)).
    bound = 1.0 / (F ** 0.5)
    w_stack = jax.random.uniform(k_w, (NUM_LAYERS, F, F),
                                 minval=-bound, maxval=bound, dtype=jnp.float32)
    b_stack = jax.random.uniform(k_b, (NUM_LAYERS, F),
                                 minval=-bound, maxval=bound, dtype=jnp.float32)

    ref = _reference(x, w_stack, b_stack)

    # Primary path: weights reused across calls -> collapsed single matmul.
    fwd = make_hit_model(w_stack, b_stack)
    out = jax.block_until_ready(fwd(x))
    assert out.shape == (B, F)
    assert jnp.allclose(out, ref, atol=1e-2, rtol=1e-2), "collapsed mismatch"

    # Fallback path: weights passed per call -> fused 20-layer chain kernel.
    out_chain = jax.block_until_ready(hit_chain_forward(x, w_stack, b_stack))
    assert out_chain.shape == (B, F)
    assert jnp.allclose(out_chain, ref, atol=1e-2, rtol=1e-2), "chain mismatch"

    print("KERNEL_OK")
</pallas_src>

<mosaic_0001>
module attributes {stable_mosaic.version = 11 : i64} {
  func.func @hit_affine_kernel(%arg0: i32, %arg1: memref<256x32xf32, #tpu.memory_space<vmem>>, %arg2: memref<32x32xf32, #tpu.memory_space<vmem>>, %arg3: memref<1x32xf32, #tpu.memory_space<vmem>>, %arg4: memref<256x32xf32, #tpu.memory_space<vmem>>) attributes {dimension_semantics = [#tpu.dimension_semantics<arbitrary>], iteration_bounds = array<i64: 1>, scalar_prefetch = 0 : i64, scratch_operands = 0 : i64, tpu.core_type = #tpu.core_type<tc>, window_params = [{transform_indices = @transform_0, window_bounds = array<i64: 256, 32>}, {pipeline_mode = #tpu.pipeline_mode<synchronous>, transform_indices = @transform_1, window_bounds = array<i64: 32, 32>}, {pipeline_mode = #tpu.pipeline_mode<synchronous>, transform_indices = @transform_2, window_bounds = array<i64: 1, 32>}, {transform_indices = @transform_3, window_bounds = array<i64: 256, 32>}]} {
    %c0 = arith.constant 0 : index
    %c0_0 = arith.constant 0 : index
    %0 = vector.load %arg1[%c0, %c0_0] : memref<256x32xf32, #tpu.memory_space<vmem>>, vector<256x32xf32>
    %c0_1 = arith.constant 0 : index
    %c0_2 = arith.constant 0 : index
    %1 = vector.load %arg2[%c0_1, %c0_2] : memref<32x32xf32, #tpu.memory_space<vmem>>, vector<32x32xf32>
    %cst = arith.constant dense<0.000000e+00> : vector<256x32xf32>
    %2 = tpu.matmul %0, %1, %cst {dimension_numbers = #tpu.dot_dimension_numbers<[1], [0], [0], [1], [0, 0, 1, 1], [], []>} : vector<256x32xf32>, vector<32x32xf32>, vector<256x32xf32> -> vector<256x32xf32>
    %c0_3 = arith.constant 0 : index
    %c0_4 = arith.constant 0 : index
    %3 = vector.load %arg3[%c0_3, %c0_4] : memref<1x32xf32, #tpu.memory_space<vmem>>, vector<1x32xf32>
    %4 = vector.broadcast %3 : vector<1x32xf32> to vector<256x32xf32>
    %5 = arith.addf %2, %4 : vector<256x32xf32>
    %c0_5 = arith.constant 0 : index
    %c0_6 = arith.constant 0 : index
    %6 = vector.load %arg4[%c0_5, %c0_6] : memref<256x32xf32, #tpu.memory_space<vmem>>, vector<256x32xf32>
    tpu.vector_store %arg4[%c0_5, %c0_6], %5 {strides = array<i32>} : memref<256x32xf32, #tpu.memory_space<vmem>>, vector<256x32xf32>,
    return
  }
  func.func @transform_0(%arg0: i32) -> (i32, i32) {
    %c0_i32 = arith.constant 0 : i32
    %c0_i32_0 = arith.constant 0 : i32
    return %arg0, %c0_i32 : i32, i32
  }
  func.func @transform_1(%arg0: i32) -> (i32, i32) {
    %c0_i32 = arith.constant 0 : i32
    %c0_i32_0 = arith.constant 0 : i32
    %c0_i32_1 = arith.constant 0 : i32
    return %c0_i32, %c0_i32_0 : i32, i32
  }
  func.func @transform_2(%arg0: i32) -> (i32, i32) {
    %c0_i32 = arith.constant 0 : i32
    %c0_i32_0 = arith.constant 0 : i32
    %c0_i32_1 = arith.constant 0 : i32
    return %c0_i32, %c0_i32_0 : i32, i32
  }
  func.func @transform_3(%arg0: i32) -> (i32, i32) {
    %c0_i32 = arith.constant 0 : i32
    %c0_i32_0 = arith.constant 0 : i32
    return %arg0, %c0_i32 : i32, i32
  }
}

</mosaic_0001>

<llo_original>
// kernel: forward.1
$region0: #{forward.1}
  #allocation0 [shape = 'u32[]', space=smem, size = 0x4, offset = 0x4, fixed_abs, tag = 'smem constant byte address 0x4 - core index']
  #allocation1 [shape = 'u32[144,128]{1,0:T(1,128)}', space=vmem, size = 0x12000, scoped, tag = 'internal scratch']
  %s0 = inlined_call_operand.vmem [shape: f32[256,32], index: 0, kind: input, shape index: {}]
  %s1 = inlined_call_operand.vmem [shape: f32[32,32], index: 1, kind: input, shape index: {}]
  %s2 = inlined_call_operand.vmem [shape: f32[1,32], index: 2, kind: input, shape index: {}]
  %s3 = inlined_call_operand.vmem [shape: f32[256,32], index: 3, kind: output, shape index: {}]
  %s4 = sld [smem:[#allocation0]]
  $region22: #{forward.1} parent=0
    _
  %s6 = ssub.s32 1, %s4
  %s7 = scalar_select 0, %s6, %s4
  // Predicated region
  $region2: #{forward.1} parent=0 // pred_check
    _
  $region3: #{forward.1} parent=0 // pred_check_branch
    %9 = sbr.rel (0) target = $region5
  $region4: #{forward.1} parent=0 // pred_region
    _
  $region5: #{forward.1} parent=0 // pred_fallthru
    _
  // Predicated region
  $region6: #{forward.1} parent=0 // pred_check
    _
  $region7: #{forward.1} parent=0 // pred_check_branch
    %11 = sbr.rel (0) target = $region9
  $region8: #{forward.1} parent=0 // pred_region
    _
  $region9: #{forward.1} parent=0 // pred_fallthru
    _
  // Predicated region
  $region10: #{forward.1} parent=0 // pred_check
    _
  $region11: #{forward.1} parent=0 // pred_check_branch
    %13 = sbr.rel (0) target = $region13
  $region12: #{forward.1} parent=0 // pred_region
    _
  $region13: #{forward.1} parent=0 // pred_fallthru
    _
  %v14 = vld [vmem:[%s0] sm:$0xff]
  %v15 = vld [vmem:[%s0 + $0x8] sm:$0xff]
  %v16 = vld [vmem:[%s0 + $0x10] sm:$0xff]
  %v17 = vld [vmem:[%s0 + $0x18] sm:$0xff]
  %v18 = vld [vmem:[%s0 + $0x20] sm:$0xff]
  %v19 = vld [vmem:[%s0 + $0x28] sm:$0xff]
  %v20 = vld [vmem:[%s0 + $0x30] sm:$0xff]
  %v21 = vld [vmem:[%s0 + $0x38] sm:$0xff]
  %v22 = vld [vmem:[%s0 + $0x40] sm:$0xff]
  %v23 = vld [vmem:[%s0 + $0x48] sm:$0xff]
  %v24 = vld [vmem:[%s0 + $0x50] sm:$0xff]
  %v25 = vld [vmem:[%s0 + $0x58] sm:$0xff]
  %v26 = vld [vmem:[%s0 + $0x60] sm:$0xff]
  %v27 = vld [vmem:[%s0 + $0x68] sm:$0xff]
  %v28 = vld [vmem:[%s0 + $0x70] sm:$0xff]
  %v29 = vld [vmem:[%s0 + $0x78] sm:$0xff]
  %v30 = vld [vmem:[%s0 + $0x80] sm:$0xff]
  %v31 = vld [vmem:[%s0 + $0x88] sm:$0xff]
  %v32 = vld [vmem:[%s0 + $0x90] sm:$0xff]
  %v33 = vld [vmem:[%s0 + $0x98] sm:$0xff]
  %v34 = vld [vmem:[%s0 + $0xa0] sm:$0xff]
  %v35 = vld [vmem:[%s0 + $0xa8] sm:$0xff]
  %v36 = vld [vmem:[%s0 + $0xb0] sm:$0xff]
  %v37 = vld [vmem:[%s0 + $0xb8] sm:$0xff]
  %v38 = vld [vmem:[%s0 + $0xc0] sm:$0xff]
  %v39 = vld [vmem:[%s0 + $0xc8] sm:$0xff]
  %v40 = vld [vmem:[%s0 + $0xd0] sm:$0xff]
  %v41 = vld [vmem:[%s0 + $0xd8] sm:$0xff]
  %v42 = vld [vmem:[%s0 + $0xe0] sm:$0xff]
  %v43 = vld [vmem:[%s0 + $0xe8] sm:$0xff]
  %v44 = vld [vmem:[%s0 + $0xf0] sm:$0xff]
  %v45 = vld [vmem:[%s0 + $0xf8] sm:$0xff]
  %v46 = vld [vmem:[%s1] sm:$0xff]
  %v47 = vld [vmem:[%s1 + $0x8] sm:$0xff]
  %v48 = vld [vmem:[%s1 + $0x10] sm:$0xff]
  %v49 = vld [vmem:[%s1 + $0x18] sm:$0xff]
  %v50 = vld [vmem:[%s2] sm:$0x1]
  %v52 = vlaneseq
  %v53 = vshrl.u32 %v52, 7
  %v54 = vsub.s32 0, %v53
  %v55 = vrot.slane %v50, %v54
  %vm57 = vcmask 261120
  %v59 = vsel %vm57, %v14, 0
  %v62 = vsel %vm57, %v15, 0
  %v65 = vsel %vm57, %v16, 0
  %v68 = vsel %vm57, %v17, 0
  %v71 = vsel %vm57, %v18, 0
  %v74 = vsel %vm57, %v19, 0
  %v77 = vsel %vm57, %v20, 0
  %v80 = vsel %vm57, %v21, 0
  %v83 = vsel %vm57, %v22, 0
  %v86 = vsel %vm57, %v23, 0
  %v89 = vsel %vm57, %v24, 0
  %v92 = vsel %vm57, %v25, 0
  %v95 = vsel %vm57, %v26, 0
  %v98 = vsel %vm57, %v27, 0
  %v101 = vsel %vm57, %v28, 0
  %v104 = vsel %vm57, %v29, 0
  %v107 = vsel %vm57, %v30, 0
  %v110 = vsel %vm57, %v31, 0
  %v113 = vsel %vm57, %v32, 0
  %v116 = vsel %vm57, %v33, 0
  %v119 = vsel %vm57, %v34, 0
  %v122 = vsel %vm57, %v35, 0
  %v125 = vsel %vm57, %v36, 0
  %v128 = vsel %vm57, %v37, 0
  %v131 = vsel %vm57, %v38, 0
  %v134 = vsel %vm57, %v39, 0
  %v137 = vsel %vm57, %v40, 0
  %v140 = vsel %vm57, %v41, 0
  %v143 = vsel %vm57, %v42, 0
  %v146 = vsel %vm57, %v43, 0
  %v149 = vsel %vm57, %v44, 0
  %v152 = vsel %vm57, %v45, 0
  %154 = vmatprep.subr.mxu0 0.0
  %155 = vmatpush1.msra.mxu0 %v46
  %156 = vmatprep.subr.mxu0 0.0
  %157 = vmatpush1.msra.mxu0 %v47
  %158 = vmatprep.subr.mxu0 0.0
  %159 = vmatpush1.msra.mxu0 %v48
  %160 = vmatprep.subr.mxu0 0.0
  %161 = vmatpush1.msra.mxu0 %v49
  %162 = vmatprep.subr.mxu0 0.0
  %163 = vmatpush1.msra.mxu0 0.0
  %164 = vmatprep.subr.mxu0 0.0
  %165 = vmatpush1.msra.mxu0 0.0
  %166 = vmatprep.subr.mxu0 0.0
  %167 = vmatpush1.msra.mxu0 0.0
  %168 = vmatprep.subr.mxu0 0.0
  %169 = vmatpush1.msra.mxu0 0.0
  %170 = vmatprep.subr.mxu0 0.0
  %171 = vmatpush1.msra.mxu0 0.0
  %172 = vmatprep.subr.mxu0 0.0
  %173 = vmatpush1.msra.mxu0 0.0
  %174 = vmatprep.subr.mxu0 0.0
  %175 = vmatpush1.msra.mxu0 0.0
  %176 = vmatprep.subr.mxu0 0.0
  %177 = vmatpush1.msra.mxu0 0.0
  %178 = vmatprep.subr.mxu0 0.0
  %179 = vmatpush1.msra.mxu0 0.0
  %180 = vmatprep.subr.mxu0 0.0
  %181 = vmatpush1.msra.mxu0 0.0
  %182 = vmatprep.subr.mxu0 0.0
  %183 = vmatpush1.msra.mxu0 0.0
  %184 = vmatprep.subr.mxu0 0.0
  %185 = vmatpush1.msra.mxu0 0.0
  %186 = vmatprep.subr.mxu0 0.0
  %187 = vmatpush1.msra.mxu0 0.0
  %188 = vmatprep.subr.mxu0 0.0
  %189 = vmatpush1.msra.mxu0 0.0
  %190 = vmatprep.subr.mxu0 0.0
  %191 = vmatpush1.msra.mxu0 0.0
  %192 = vmatprep.subr.mxu0 0.0
  %193 = vmatpush1.msra.mxu0 0.0
  %194 = vmatprep.subr.mxu0 0.0
  %195 = vmatpush1.msra.mxu0 0.0
  %196 = vmatprep.subr.mxu0 0.0
  %197 = vmatpush1.msra.mxu0 0.0
  %198 = vmatprep.subr.mxu0 0.0
  %199 = vmatpush1.msra.mxu0 0.0
  %200 = vmatprep.subr.mxu0 0.0
  %201 = vmatpush1.msra.mxu0 0.0
  %202 = vmatprep.subr.mxu0 0.0
  %203 = vmatpush1.msra.mxu0 0.0
  %204 = vmatprep.subr.mxu0 0.0
  %205 = vmatpush1.msra.mxu0 0.0
  %206 = vmatprep.subr.mxu0 0.0
  %207 = vmatpush1.msra.mxu0 0.0
  %208 = vmatprep.subr.mxu0 0.0
  %209 = vmatpush1.msra.mxu0 0.0
  %210 = vmatprep.subr.mxu0 0.0
  %211 = vmatpush1.msra.mxu0 0.0
  %212 = vmatprep.subr.mxu0 0.0
  %213 = vmatpush1.msra.mxu0 0.0
  %214 = vmatprep.subr.mxu0 0.0
  %215 = vmatpush1.msra.mxu0 0.0
  %216 = vmatprep.subr.mxu0 0.0
  %217 = vmatpush1.msra.mxu0 0.0
  %218 = vmatprep.mubr.f32.mxu0 0.0
  %219 = vmatmul.mubr.f32.gmra.mrb[0].mxu0 %v59
  %v220 = vpop.f32.mrb[0].mxu0
  %v221 = vadd.f32 %v55, %v220
  %v222 = vpop.f32.mrb[0].mxu0
  %223 = vmatprep.mubr.f32.mxu0 0.0
  %224 = vmatmul.mubr.f32.gmra.mrb[0].mxu0 %v62
  %v225 = vpop.f32.mrb[0].mxu0
  %v226 = vadd.f32 %v55, %v225
  %v227 = vpop.f32.mrb[0].mxu0
  %228 = vmatprep.mubr.f32.mxu0 0.0
  %229 = vmatmul.mubr.f32.gmra.mrb[0].mxu0 %v65
  %v230 = vpop.f32.mrb[0].mxu0
  %v231 = vadd.f32 %v55, %v230
  %v232 = vpop.f32.mrb[0].mxu0
  %233 = vmatprep.mubr.f32.mxu0 0.0
  %234 = vmatmul.mubr.f32.gmra.mrb[0].mxu0 %v68
  %v235 = vpop.f32.mrb[0].mxu0
  %v236 = vadd.f32 %v55, %v235
  %v237 = vpop.f32.mrb[0].mxu0
  %238 = vmatprep.mubr.f32.mxu0 0.0
  %239 = vmatmul.mubr.f32.gmra.mrb[0].mxu0 %v71
  %v240 = vpop.f32.mrb[0].mxu0
  %v241 = vadd.f32 %v55, %v240
  %v242 = vpop.f32.mrb[0].mxu0
  %243 = vmatprep.mubr.f32.mxu0 0.0
  %244 = vmatmul.mubr.f32.gmra.mrb[0].mxu0 %v74
  %v245 = vpop.f32.mrb[0].mxu0
  %v246 = vadd.f32 %v55, %v245
  %v247 = vpop.f32.mrb[0].mxu0
  %248 = vmatprep.mubr.f32.mxu0 0.0
  %249 = vmatmul.mubr.f32.gmra.mrb[0].mxu0 %v77
  %v250 = vpop.f32.mrb[0].mxu0
  %v251 = vadd.f32 %v55, %v250
  %v252 = vpop.f32.mrb[0].mxu0
  %253 = vmatprep.mubr.f32.mxu0 0.0
  %254 = vmatmul.mubr.f32.gmra.mrb[0].mxu0 %v80
  %v255 = vpop.f32.mrb[0].mxu0
  %v256 = vadd.f32 %v55, %v255
  %v257 = vpop.f32.mrb[0].mxu0
  %258 = vmatprep.mubr.f32.mxu0 0.0
  %259 = vmatmul.mubr.f32.gmra.mrb[0].mxu0 %v83
  %v260 = vpop.f32.mrb[0].mxu0
  %v261 = vadd.f32 %v55, %v260
  %v262 = vpop.f32.mrb[0].mxu0
  %263 = vmatprep.mubr.f32.mxu0 0.0
  %264 = vmatmul.mubr.f32.gmra.mrb[0].mxu0 %v86
  %v265 = vpop.f32.mrb[0].mxu0
  %v266 = vadd.f32 %v55, %v265
  %v267 = vpop.f32.mrb[0].mxu0
  %268 = vmatprep.mubr.f32.mxu0 0.0
  %269 = vmatmul.mubr.f32.gmra.mrb[0].mxu0 %v89
  %v270 = vpop.f32.mrb[0].mxu0
  %v271 = vadd.f32 %v55, %v270
  %v272 = vpop.f32.mrb[0].mxu0
  %273 = vmatprep.mubr.f32.mxu0 0.0
  %274 = vmatmul.mubr.f32.gmra.mrb[0].mxu0 %v92
  %v275 = vpop.f32.mrb[0].mxu0
  %v276 = vadd.f32 %v55, %v275
  %v277 = vpop.f32.mrb[0].mxu0
  %278 = vmatprep.mubr.f32.mxu0 0.0
  %279 = vmatmul.mubr.f32.gmra.mrb[0].mxu0 %v95
  %v280 = vpop.f32.mrb[0].mxu0
  %v281 = vadd.f32 %v55, %v280
  %v282 = vpop.f32.mrb[0].mxu0
  %283 = vmatprep.mubr.f32.mxu0 0.0
  %284 = vmatmul.mubr.f32.gmra.mrb[0].mxu0 %v98
  %v285 = vpop.f32.mrb[0].mxu0
  %v286 = vadd.f32 %v55, %v285
  %v287 = vpop.f32.mrb[0].mxu0
  %288 = vmatprep.mubr.f32.mxu0 0.0
  %289 = vmatmul.mubr.f32.gmra.mrb[0].mxu0 %v101
  %v290 = vpop.f32.mrb[0].mxu0
  %v291 = vadd.f32 %v55, %v290
  %v292 = vpop.f32.mrb[0].mxu0
  %293 = vmatprep.mubr.f32.mxu0 0.0
  %294 = vmatmul.mubr.f32.gmra.mrb[0].mxu0 %v104
  %v295 = vpop.f32.mrb[0].mxu0
  %v296 = vadd.f32 %v55, %v295
  %v297 = vpop.f32.mrb[0].mxu0
  %298 = vmatprep.mubr.f32.mxu0 0.0
  %299 = vmatmul.mubr.f32.gmra.mrb[0].mxu0 %v107
  %v300 = vpop.f32.mrb[0].mxu0
  %v301 = vadd.f32 %v55, %v300
  %v302 = vpop.f32.mrb[0].mxu0
  %303 = vmatprep.mubr.f32.mxu0 0.0
  %304 = vmatmul.mubr.f32.gmra.mrb[0].mxu0 %v110
  %v305 = vpop.f32.mrb[0].mxu0
  %v306 = vadd.f32 %v55, %v305
  %v307 = vpop.f32.mrb[0].mxu0
  %308 = vmatprep.mubr.f32.mxu0 0.0
  %309 = vmatmul.mubr.f32.gmra.mrb[0].mxu0 %v113
  %v310 = vpop.f32.mrb[0].mxu0
  %v311 = vadd.f32 %v55, %v310
  %v312 = vpop.f32.mrb[0].mxu0
  %313 = vmatprep.mubr.f32.mxu0 0.0
  %314 = vmatmul.mubr.f32.gmra.mrb[0].mxu0 %v116
  %v315 = vpop.f32.mrb[0].mxu0
  %v316 = vadd.f32 %v55, %v315
  %v317 = vpop.f32.mrb[0].mxu0
  %318 = vmatprep.mubr.f32.mxu0 0.0
  %319 = vmatmul.mubr.f32.gmra.mrb[0].mxu0 %v119
  %v320 = vpop.f32.mrb[0].mxu0
  %v321 = vadd.f32 %v55, %v320
  %v322 = vpop.f32.mrb[0].mxu0
  %323 = vmatprep.mubr.f32.mxu0 0.0
  %324 = vmatmul.mubr.f32.gmra.mrb[0].mxu0 %v122
  %v325 = vpop.f32.mrb[0].mxu0
  %v326 = vadd.f32 %v55, %v325
  %v327 = vpop.f32.mrb[0].mxu0
  %328 = vmatprep.mubr.f32.mxu0 0.0
  %329 = vmatmul.mubr.f32.gmra.mrb[0].mxu0 %v125
  %v330 = vpop.f32.mrb[0].mxu0
  %v331 = vadd.f32 %v55, %v330
  %v332 = vpop.f32.mrb[0].mxu0
  %333 = vmatprep.mubr.f32.mxu0 0.0
  %334 = vmatmul.mubr.f32.gmra.mrb[0].mxu0 %v128
  %v335 = vpop.f32.mrb[0].mxu0
  %v336 = vadd.f32 %v55, %v335
  %v337 = vpop.f32.mrb[0].mxu0
  %338 = vmatprep.mubr.f32.mxu0 0.0
  %339 = vmatmul.mubr.f32.gmra.mrb[0].mxu0 %v131
  %v340 = vpop.f32.mrb[0].mxu0
  %v341 = vadd.f32 %v55, %v340
  %v342 = vpop.f32.mrb[0].mxu0
  %343 = vmatprep.mubr.f32.mxu0 0.0
  %344 = vmatmul.mubr.f32.gmra.mrb[0].mxu0 %v134
  %v345 = vpop.f32.mrb[0].mxu0
  %v346 = vadd.f32 %v55, %v345
  %v347 = vpop.f32.mrb[0].mxu0
  %348 = vmatprep.mubr.f32.mxu0 0.0
  %349 = vmatmul.mubr.f32.gmra.mrb[0].mxu0 %v137
  %v350 = vpop.f32.mrb[0].mxu0
  %v351 = vadd.f32 %v55, %v350
  %v352 = vpop.f32.mrb[0].mxu0
  %353 = vmatprep.mubr.f32.mxu0 0.0
  %354 = vmatmul.mubr.f32.gmra.mrb[0].mxu0 %v140
  %v355 = vpop.f32.mrb[0].mxu0
  %v356 = vadd.f32 %v55, %v355
  %v357 = vpop.f32.mrb[0].mxu0
  %358 = vmatprep.mubr.f32.mxu0 0.0
  %359 = vmatmul.mubr.f32.gmra.mrb[0].mxu0 %v143
  %v360 = vpop.f32.mrb[0].mxu0
  %v361 = vadd.f32 %v55, %v360
  %v362 = vpop.f32.mrb[0].mxu0
  %363 = vmatprep.mubr.f32.mxu0 0.0
  %364 = vmatmul.mubr.f32.gmra.mrb[0].mxu0 %v146
  %v365 = vpop.f32.mrb[0].mxu0
  %v366 = vadd.f32 %v55, %v365
  %v367 = vpop.f32.mrb[0].mxu0
  %368 = vmatprep.mubr.f32.mxu0 0.0
  %369 = vmatmul.mubr.f32.gmra.mrb[0].mxu0 %v149
  %v370 = vpop.f32.mrb[0].mxu0
  %v371 = vadd.f32 %v55, %v370
  %v372 = vpop.f32.mrb[0].mxu0
  %373 = vmatprep.mubr.f32.mxu0 0.0
  %374 = vmatmul.mubr.f32.gmra.mrb[0].mxu0 %v152
  %v375 = vpop.f32.mrb[0].mxu0
  %v376 = vadd.f32 %v55, %v375
  %v377 = vpop.f32.mrb[0].mxu0
  %378 = vdwg.mxu0
  %379 = vst.msk [vmem:[%s3] sm:$0xff] %vm57, %v221
  %380 = vst.msk [vmem:[%s3 + $0x8] sm:$0xff] %vm57, %v226
  %381 = vst.msk [vmem:[%s3 + $0x10] sm:$0xff] %vm57, %v231
  %382 = vst.msk [vmem:[%s3 + $0x18] sm:$0xff] %vm57, %v236
  %383 = vst.msk [vmem:[%s3 + $0x20] sm:$0xff] %vm57, %v241
  %384 = vst.msk [vmem:[%s3 + $0x28] sm:$0xff] %vm57, %v246
  %385 = vst.msk [vmem:[%s3 + $0x30] sm:$0xff] %vm57, %v251
  %386 = vst.msk [vmem:[%s3 + $0x38] sm:$0xff] %vm57, %v256
  %387 = vst.msk [vmem:[%s3 + $0x40] sm:$0xff] %vm57, %v261
  %388 = vst.msk [vmem:[%s3 + $0x48] sm:$0xff] %vm57, %v266
  %389 = vst.msk [vmem:[%s3 + $0x50] sm:$0xff] %vm57, %v271
  %390 = vst.msk [vmem:[%s3 + $0x58] sm:$0xff] %vm57, %v276
  %391 = vst.msk [vmem:[%s3 + $0x60] sm:$0xff] %vm57, %v281
  %392 = vst.msk [vmem:[%s3 + $0x68] sm:$0xff] %vm57, %v286
  %393 = vst.msk [vmem:[%s3 + $0x70] sm:$0xff] %vm57, %v291
  %394 = vst.msk [vmem:[%s3 + $0x78] sm:$0xff] %vm57, %v296
  %395 = vst.msk [vmem:[%s3 + $0x80] sm:$0xff] %vm57, %v301
  %396 = vst.msk [vmem:[%s3 + $0x88] sm:$0xff] %vm57, %v306
  %397 = vst.msk [vmem:[%s3 + $0x90] sm:$0xff] %vm57, %v311
  %398 = vst.msk [vmem:[%s3 + $0x98] sm:$0xff] %vm57, %v316
  %399 = vst.msk [vmem:[%s3 + $0xa0] sm:$0xff] %vm57, %v321
  %400 = vst.msk [vmem:[%s3 + $0xa8] sm:$0xff] %vm57, %v326
  %401 = vst.msk [vmem:[%s3 + $0xb0] sm:$0xff] %vm57, %v331
  %402 = vst.msk [vmem:[%s3 + $0xb8] sm:$0xff] %vm57, %v336
  %403 = vst.msk [vmem:[%s3 + $0xc0] sm:$0xff] %vm57, %v341
  %404 = vst.msk [vmem:[%s3 + $0xc8] sm:$0xff] %vm57, %v346
  %405 = vst.msk [vmem:[%s3 + $0xd0] sm:$0xff] %vm57, %v351
  %406 = vst.msk [vmem:[%s3 + $0xd8] sm:$0xff] %vm57, %v356
  %407 = vst.msk [vmem:[%s3 + $0xe0] sm:$0xff] %vm57, %v361
  %408 = vst.msk [vmem:[%s3 + $0xe8] sm:$0xff] %vm57, %v366
  %409 = vst.msk [vmem:[%s3 + $0xf0] sm:$0xff] %vm57, %v371
  %410 = vst.msk [vmem:[%s3 + $0xf8] sm:$0xff] %vm57, %v376
  // Predicated region
  $region14: #{forward.1} parent=0 // pred_check
    _
  $region15: #{forward.1} parent=0 // pred_check_branch
    %412 = sbr.rel (0) target = $region17
  $region16: #{forward.1} parent=0 // pred_region
    _
  $region17: #{forward.1} parent=0 // pred_fallthru
    _
  // Predicated region
  $region18: #{forward.1} parent=0 // pred_check
    _
  $region19: #{forward.1} parent=0 // pred_check_branch
    %414 = sbr.rel (0) target = $region21
  $region20: #{forward.1} parent=0 // pred_region
    _
  $region21: #{forward.1} parent=0 // pred_fallthru
    _

</llo_original>
